<compile_context>
chip_gen: v5e
topology: v5e:2x2
jax: 0.10.0
libtpu: 0.0.40
codegen_flags: <defaults>
</compile_context>

<pallas_src>
import jax
import jax.numpy as jnp
from jax.experimental import pallas as pl
from jax.experimental.pallas import tpu as pltpu


# ----------------------------------------------------------------------------
# "Module init": deterministic positional-encoding buffer (plain JAX).
# ----------------------------------------------------------------------------
def make_positional_encoding(sequence_length: int, embed_dim: int) -> jnp.ndarray:
    """Replicates the PyTorch __init__ buffer construction (even embed_dim)."""
    assert embed_dim % 2 == 0, (
        "Only even embed_dim is supported: the PyTorch odd-embed_dim branch "
        "builds a (S, D+1) buffer that cannot broadcast-add onto (B, S, D)."
    )
    position = jnp.arange(sequence_length, dtype=jnp.float32)[:, None]        # (S, 1)
    i = jnp.arange(embed_dim, dtype=jnp.float32)                              # (D,)
    angle_rates = 1.0 / jnp.power(10000.0, 2.0 * jnp.floor(i / 2.0) / embed_dim)
    angle_rads = position * angle_rates                                        # (S, D)
    col = jnp.arange(embed_dim)
    # even columns -> sin, odd columns -> cos (same as the strided assignment)
    pos_encoding = jnp.where((col % 2) == 0, jnp.sin(angle_rads), jnp.cos(angle_rads))
    # TODO(synk): the original PyTorch odd-embed_dim branch is shape-inconsistent
    # in the source module and is intentionally not replicated here.
    return pos_encoding.astype(jnp.float32)                                    # (S, D)


# ----------------------------------------------------------------------------
# Kernel body: pure elementwise add, accumulated in f32, cast on store.
# Works for both block layouts:
#   folded batch : x_ref/o_ref (B, ts, td), pe_ref (ts, td)  -> broadcast add
#   squeezed     : x_ref/o_ref (ts, td),    pe_ref (ts, td)
# ----------------------------------------------------------------------------
def _add_pe_kernel(x_ref, pe_ref, o_ref):
    o_ref[...] = (x_ref[...].astype(jnp.float32) + pe_ref[...]).astype(o_ref.dtype)


# ----------------------------------------------------------------------------
# Tiling helpers.
# ----------------------------------------------------------------------------
_TARGET_BLOCK_BYTES = 4 << 20          # ~4 MiB of x data per grid step
_SUBLANE = {4: 8, 2: 16, 1: 32}        # sublane alignment per itemsize


def _round_down(x: int, m: int) -> int:
    return max(m, (x // m) * m)


def positional_encoding_forward(
    x: jnp.ndarray,
    pe: jnp.ndarray,
    *,
    target_block_bytes: int = _TARGET_BLOCK_BYTES,
) -> jnp.ndarray:
    """x: (B, S, D); pe: (S_full, D) float32 with S_full >= S."""
    B, S, D = x.shape
    assert pe.shape[0] >= S and pe.shape[1] == D, "pe buffer too small for x"

    out_dtype = x.dtype
    itemsize = jnp.dtype(x.dtype).itemsize
    sub_align = _SUBLANE.get(itemsize, 8)

    # Keep pe in f32 so the add matches the PyTorch f32-buffer promotion;
    # the kernel casts only on the store.
    pe_sliced = pe[:S, :].astype(jnp.float32)     # matches buffer[:, :seq, :]

    # Lane-dense last dim: pad D up to a multiple of 128 so the output stores
    # are full-lane vst instead of masked partial stores.
    D_pad = ((D + 127) // 128) * 128 if D % 128 != 0 else D
    D_pad = max(128, D_pad)
    if D_pad != D:
        x_in = jnp.pad(x, ((0, 0), (0, 0), (0, D_pad - D)))
        pe_in = jnp.pad(pe_sliced, ((0, 0), (0, D_pad - D)))
    else:
        x_in, pe_in = x, pe_sliced

    # Byte-based per-step budget for x (dtype-agnostic DMA granularity).
    target_elems = max(sub_align * 128, target_block_bytes // itemsize)

    # Fold the whole batch into the block when even a minimal (sub_align, 128)
    # spatial tile per batch element fits the budget -> cuts step count by B.
    fold_batch = (B * sub_align * 128) <= target_elems
    slice_elems = target_elems // B if fold_batch else target_elems

    # td: lane axis, multiple of 128.  ts: sublane axis, multiple of sub_align
    # (or the full short extent).  pl.cdiv grids allow a partial last block,
    # so tiles never need to divide S exactly.
    td = min(D_pad, _round_down(slice_elems // sub_align, 128))
    if S <= sub_align or S % sub_align == 0:
        ts_max = S
    else:
        ts_max = (S // sub_align) * sub_align
    ts = min(ts_max, _round_down(slice_elems // td, sub_align))

    n_s = pl.cdiv(S, ts)
    n_d = pl.cdiv(D_pad, td)

    if fold_batch:
        grid = (n_s, n_d)
        x_spec = pl.BlockSpec((B, ts, td), lambda s, d: (0, s, d))
        pe_spec = pl.BlockSpec((ts, td), lambda s, d: (s, d))
        out_spec = pl.BlockSpec((B, ts, td), lambda s, d: (0, s, d))
        semantics = ("parallel", "parallel")
        x_block_bytes = B * ts * td * itemsize
    else:
        # Batch innermost: pe's index_map ignores b, so its tile stays
        # resident across consecutive batch steps (no re-DMA per batch).
        grid = (n_s, n_d, B)
        x_spec = pl.BlockSpec((None, ts, td), lambda s, d, b: (b, s, d))
        pe_spec = pl.BlockSpec((ts, td), lambda s, d, b: (s, d))
        out_spec = pl.BlockSpec((None, ts, td), lambda s, d, b: (b, s, d))
        semantics = ("parallel", "parallel", "parallel")
        x_block_bytes = ts * td * itemsize

    # VMEM footprint: x and out double-buffered at block size, pe (f32)
    # double-buffered at its (ts, td) block.  2x headroom, floor 16 MiB,
    # cap 48 MiB (leaves room on v7x's 64 MiB physical VMEM).
    pe_block_bytes = ts * td * 4
    footprint = 2 * (2 * x_block_bytes) + 2 * pe_block_bytes
    vmem_limit = int(min(max(2 * footprint, 16 << 20), 48 << 20))

    out = pl.pallas_call(
        _add_pe_kernel,
        out_shape=jax.ShapeDtypeStruct((B, S, D_pad), out_dtype),
        grid=grid,
        in_specs=[x_spec, pe_spec],
        out_specs=out_spec,
        compiler_params=pltpu.CompilerParams(
            dimension_semantics=semantics,
            vmem_limit_bytes=vmem_limit,
        ),
        cost_estimate=pl.CostEstimate(
            flops=B * S * D_pad,
            transcendentals=0,
            bytes_accessed=2 * B * S * D_pad * itemsize + S * D_pad * 4,
        ),
    )(x_in, pe_in)

    if D_pad != D:
        out = out[:, :, :D]
    return out


if __name__ == "__main__":
    # 1) Small shapes consistent with the module's forward: (batch, seq, embed).
    B, SEQ_LEN, EMBED_DIM = 2, 8, 32
    key = jax.random.PRNGKey(0)
    x = jax.random.normal(key, (B, SEQ_LEN, EMBED_DIM), dtype=jnp.float32)
    pe = make_positional_encoding(SEQ_LEN, EMBED_DIM)
    out = jax.block_until_ready(positional_encoding_forward(x, pe))
    ref = x + pe[None, :SEQ_LEN, :]
    assert out.shape == (B, SEQ_LEN, EMBED_DIM)
    assert jnp.allclose(out, ref, atol=1e-6), "mismatch vs reference (small)"

    # 2) Larger shape exercising the lane-dense tiled, batch-folded path.
    B2, S2, D2 = 2, 1024, 256
    x2 = jax.random.normal(jax.random.PRNGKey(1), (B2, S2, D2), dtype=jnp.float32)
    pe2 = make_positional_encoding(S2, D2)
    out2 = jax.block_until_ready(positional_encoding_forward(x2, pe2))
    ref2 = x2 + pe2[None, :, :]
    assert jnp.allclose(out2, ref2, atol=1e-6), "mismatch vs reference (tiled)"

    # 3) bf16 with awkward S/D: exercises D padding, partial last S-block and
    #    f32 accumulation inside the kernel.
    B3, S3, D3 = 3, 24, 80
    x3 = jax.random.normal(jax.random.PRNGKey(2), (B3, S3, D3), dtype=jnp.bfloat16)
    pe3 = make_positional_encoding(S3, D3)
    out3 = jax.block_until_ready(positional_encoding_forward(x3, pe3))
    ref3 = (x3.astype(jnp.float32) + pe3[None, :, :]).astype(jnp.bfloat16)
    assert jnp.allclose(out3.astype(jnp.float32), ref3.astype(jnp.float32),
                        rtol=2e-2, atol=2e-2), "mismatch vs reference (bf16)"

    # 4) Force the non-folded (batch-innermost grid) path via a tiny block budget.
    B4, S4, D4 = 4, 64, 256
    x4 = jax.random.normal(jax.random.PRNGKey(3), (B4, S4, D4), dtype=jnp.float32)
    pe4 = make_positional_encoding(S4, D4)
    out4 = jax.block_until_ready(
        positional_encoding_forward(x4, pe4, target_block_bytes=8 << 10))
    ref4 = x4 + pe4[None, :, :]
    assert jnp.allclose(out4, ref4, atol=1e-6), "mismatch vs reference (batch grid)"

    print("KERNEL_OK")
</pallas_src>

<mosaic_0001>
module attributes {stable_mosaic.version = 11 : i64} {
  func.func @_add_pe_kernel(%arg0: i32, %arg1: i32, %arg2: memref<2x8x128xf32, #tpu.memory_space<vmem>>, %arg3: memref<8x128xf32, #tpu.memory_space<vmem>>, %arg4: memref<2x8x128xf32, #tpu.memory_space<vmem>>) attributes {dimension_semantics = [#tpu.dimension_semantics<parallel>, #tpu.dimension_semantics<parallel>], iteration_bounds = array<i64: 1, 1>, scalar_prefetch = 0 : i64, scratch_operands = 0 : i64, tpu.core_type = #tpu.core_type<tc>, window_params = [{transform_indices = @transform_0, window_bounds = array<i64: 2, 8, 128>}, {transform_indices = @transform_1, window_bounds = array<i64: 8, 128>}, {transform_indices = @transform_2, window_bounds = array<i64: 2, 8, 128>}]} {
    %c0 = arith.constant 0 : index
    %c0_0 = arith.constant 0 : index
    %c0_1 = arith.constant 0 : index
    %0 = vector.load %arg2[%c0, %c0_0, %c0_1] : memref<2x8x128xf32, #tpu.memory_space<vmem>>, vector<2x8x128xf32>
    %c0_2 = arith.constant 0 : index
    %c0_3 = arith.constant 0 : index
    %1 = vector.load %arg3[%c0_2, %c0_3] : memref<8x128xf32, #tpu.memory_space<vmem>>, vector<8x128xf32>
    %2 = vector.shape_cast %1 : vector<8x128xf32> to vector<1x8x128xf32>
    %3 = vector.broadcast %2 : vector<1x8x128xf32> to vector<2x8x128xf32>
    %4 = arith.addf %0, %3 : vector<2x8x128xf32>
    %c0_4 = arith.constant 0 : index
    %c0_5 = arith.constant 0 : index
    %c0_6 = arith.constant 0 : index
    %5 = vector.load %arg4[%c0_4, %c0_5, %c0_6] : memref<2x8x128xf32, #tpu.memory_space<vmem>>, vector<2x8x128xf32>
    tpu.vector_store %arg4[%c0_4, %c0_5, %c0_6], %4 {strides = array<i32>} : memref<2x8x128xf32, #tpu.memory_space<vmem>>, vector<2x8x128xf32>,
    return
  }
  func.func @transform_0(%arg0: i32, %arg1: i32) -> (i32, i32, i32) {
    %c0_i32 = arith.constant 0 : i32
    %c0_i32_0 = arith.constant 0 : i32
    return %c0_i32, %arg0, %arg1 : i32, i32, i32
  }
  func.func @transform_1(%arg0: i32, %arg1: i32) -> (i32, i32) {
    %c0_i32 = arith.constant 0 : i32
    return %arg0, %arg1 : i32, i32
  }
  func.func @transform_2(%arg0: i32, %arg1: i32) -> (i32, i32, i32) {
    %c0_i32 = arith.constant 0 : i32
    %c0_i32_0 = arith.constant 0 : i32
    return %c0_i32, %arg0, %arg1 : i32, i32, i32
  }
}

</mosaic_0001>

<llo_original>
// kernel: tpu_custom_call.1
$region0: #{tpu_custom_call.1}
  #allocation0 [shape = 'u32[]', space=smem, size = 0x4, offset = 0x4, fixed_abs, tag = 'smem constant byte address 0x4 - core index']
  #allocation1 [shape = 'u32[72,128]{1,0:T(1,128)}', space=vmem, size = 0x9000, scoped, tag = 'internal scratch']
  %s0 = inlined_call_operand.hbm [shape: f32[2,8,128], index: 0, kind: input, shape index: {}]
  %s1 = inlined_call_operand.hbm [shape: f32[8,128], index: 1, kind: input, shape index: {}]
  %s2 = inlined_call_operand.hbm [shape: f32[2,8,128], index: 2, kind: output, shape index: {}]
  %s3 = sld [smem:[#allocation0]]
  $region26: #{tpu_custom_call.1} parent=0
    _
  %s5 = ssub.s32 1, %s3
  %s6 = scalar_select 0, %s5, %s3
  $region1: #{tpu_custom_call.1} parent=0
    #allocation2 [shape = 'u8[8192]{0}', space=vmem, size = 0x2000, scoped, tag = 'input window, operand 0, single buffered']
    #allocation3 [shape = 's32[1]{0}', space=sflag, size = 0x4, scoped, tag = 'scoped memory for tpu_custom_call.1']
    #allocation4 [shape = 's32[1]{0}', space=sflag, size = 0x4, scoped, tag = 'scoped memory for tpu_custom_call.1']
    #allocation5 [shape = 'u8[4096]{0}', space=vmem, size = 0x1000, scoped, tag = 'input window, operand 1, single buffered']
    #allocation6 [shape = 's32[1]{0}', space=sflag, size = 0x4, scoped, tag = 'scoped memory for tpu_custom_call.1']
    #allocation7 [shape = 'u8[8192]{0}', space=vmem, size = 0x2000, scoped, tag = 'output window, operand 0, single buffered']
    %7 = vsyncpa [#allocation3], 0
    %8 = vsyncpa [#allocation6], 0
    %9 = vsyncpa [#allocation4], 0
    // Predicated region
    $region2: #{tpu_custom_call.1} parent=1 // pred_check
      _
    $region3: #{tpu_custom_call.1} parent=1 // pred_check_branch
      %11 = sbr.rel (0) target = $region5
    $region4: #{tpu_custom_call.1} parent=1 // pred_region
      %13 = vsyncadd [#allocation3], 0
      %s14 = sshll.u32 %s0, 4
      %s15 = int_to_ptr.hbm [resolvable:$true] %s14
      %s16 = sshll.u32 [#allocation2], 4
      %s17 = int_to_ptr.vmem [resolvable:$true] %s16
      %22 = dma.hbm_to_vmem [thread:$0]  %s15, 256, %s17, [#allocation3], 128, 128, 8
    $region5: #{tpu_custom_call.1} parent=1 // pred_fallthru
      _
    // Predicated region
    $region6: #{tpu_custom_call.1} parent=1 // pred_check
      _
    $region7: #{tpu_custom_call.1} parent=1 // pred_check_branch
      %24 = sbr.rel (0) target = $region9
    $region8: #{tpu_custom_call.1} parent=1 // pred_region
      %26 = vsyncadd [#allocation6], 0
      %s28 = sshll.u32 %s1, 4
      %s29 = int_to_ptr.hbm [resolvable:$true] %s28
      %s30 = sshll.u32 [#allocation5], 4
      %s31 = int_to_ptr.vmem [resolvable:$true] %s30
      %33 = dma.hbm_to_vmem [thread:$0]  %s29, 128, %s31, [#allocation6]
    $region9: #{tpu_custom_call.1} parent=1 // pred_fallthru
      _
    // Predicated region
    $region10: #{tpu_custom_call.1} parent=1 // pred_check
      _
    $region11: #{tpu_custom_call.1} parent=1 // pred_check_branch
      %35 = sbr.rel (0) target = $region13
    $region12: #{tpu_custom_call.1} parent=1 // pred_region
      %37 = dma.done [#allocation3], 256
    $region13: #{tpu_custom_call.1} parent=1 // pred_fallthru
      _
    // Predicated region
    $region14: #{tpu_custom_call.1} parent=1 // pred_check
      _
    $region15: #{tpu_custom_call.1} parent=1 // pred_check_branch
      %39 = sbr.rel (0) target = $region17
    $region16: #{tpu_custom_call.1} parent=1 // pred_region
      %41 = dma.done [#allocation6], 128
    $region17: #{tpu_custom_call.1} parent=1 // pred_fallthru
      _
    %v42 = vld [vmem:[#allocation2] sm:$0xff]
    %v43 = vld [vmem:[#allocation2 + $0x8] sm:$0xff]
    %v44 = vld [vmem:[#allocation5] sm:$0xff]
    %v45 = vadd.f32 %v42, %v44
    %v46 = vadd.f32 %v43, %v44
    %47 = vst [vmem:[#allocation7] sm:$0xff] %v45
    %48 = vst [vmem:[#allocation7 + $0x8] sm:$0xff] %v46
    // Predicated region
    $region18: #{tpu_custom_call.1} parent=1 // pred_check
      _
    $region19: #{tpu_custom_call.1} parent=1 // pred_check_branch
      %50 = sbr.rel (0) target = $region21
    $region20: #{tpu_custom_call.1} parent=1 // pred_region
      %52 = vsyncadd [#allocation4], 0
      %s53 = sshll.u32 [#allocation7], 4
      %s54 = int_to_ptr.vmem [resolvable:$true] %s53
      %s55 = sshll.u32 %s2, 4
      %s56 = int_to_ptr.hbm [resolvable:$true] %s55
      %61 = dma.vmem_to_hbm [thread:$0]  %s54, 256, %s56, [#allocation4], 128, 128, 8
    $region21: #{tpu_custom_call.1} parent=1 // pred_fallthru
      _
    // Predicated region
    $region22: #{tpu_custom_call.1} parent=1 // pred_check
      _
    $region23: #{tpu_custom_call.1} parent=1 // pred_check_branch
      %63 = sbr.rel (0) target = $region25
    $region24: #{tpu_custom_call.1} parent=1 // pred_region
      %65 = dma.done [#allocation4], 256
    $region25: #{tpu_custom_call.1} parent=1 // pred_fallthru
      _
    %66 = vsyncpa [#allocation3], 1
    %67 = vsyncpa [#allocation6], 1
    %68 = vsyncpa [#allocation4], 1

</llo_original>
